<compile_context>
chip_gen: v7x
topology: tpu7x:2x2x1
jax: 0.10.0
libtpu: 0.0.40
codegen_flags: <defaults>
</compile_context>

<pallas_src>
import functools

import jax
import jax.numpy as jnp
import numpy as np
from jax.experimental import pallas as pl
from jax.experimental.pallas import tpu as pltpu


def _rmsnorm_kernel(x_ref, w_ref, o_ref, *, eps):
    """One (block_rows, D) tile per grid step; D on the lane axis."""
    x = x_ref[...]                                      # (blk, D), native dtype
    xf = x.astype(jnp.float32)                          # streamed through vregs
    ms = jnp.mean(xf * xf, axis=-1, keepdims=True)      # VPU mul + XLU reduce (f32 acc)
    inv = jax.lax.rsqrt(ms + eps)                       # EUP rsqrt
    scale = inv * w_ref[...].astype(jnp.float32)        # (blk, 1) * (1, D) -> (blk, D)
    o_ref[...] = (xf * scale).astype(o_ref.dtype)       # lane-dense store


def _sublane_multiple(dtype) -> int:
    """Min row granularity: 8 for 4-byte, 16 for 2-byte, 32 for 1-byte dtypes."""
    itemsize = jnp.dtype(dtype).itemsize
    if itemsize >= 4:
        return 8
    if itemsize == 2:
        return 16
    return 32


def _round_up(n, m):
    return ((n + m - 1) // m) * m


def rms_norm(x, weight, eps=1e-5, block_rows=None):
    """x: (..., d_model), weight: (d_model,). Returns same shape/dtype as x."""
    *lead, D = x.shape
    rows = 1
    for s in lead:
        rows *= int(s)

    x2 = x.reshape(rows, D)          # free reshape: D already innermost
    w2 = weight.reshape(1, D)

    in_bytes = jnp.dtype(x.dtype).itemsize
    sub = _sublane_multiple(x.dtype)

    if block_rows is not None:
        target = max(sub, (int(block_rows) // sub) * sub)
    else:
        # VMEM budget per block: double-buffered in + double-buffered out tiles
        # in the input dtype plus ~2 f32 rows of intermediates per row.
        # 24 MiB stays inside v7x's 32 MiB scoped default with headroom.
        budget = 24 * 1024 * 1024
        per_row = D * (4 * in_bytes + 2 * 4)
        target = min(1024, max(sub, budget // per_row))
        target = min(target, _round_up(rows, sub))
        # Keep >= 2 blocks when there is enough work: with
        # dimension_semantics=("parallel",) both v7x TensorCores stay busy.
        if rows >= 2 * sub:
            target = min(target, _round_up(pl.cdiv(rows, 2), sub))
        target = max(sub, (target // sub) * sub)

    grid = pl.cdiv(rows, target)     # no padding; tail block is masked by Pallas

    # Explicit scoped-VMEM limit: above v5e's 16 MiB default, well under v7x's
    # 64 MiB physical.
    block_bytes = target * D * (2 * in_bytes + 2 * in_bytes) + 2 * D * 4
    vmem_limit = int(min(max(2 * block_bytes, 32 * 1024 * 1024),
                         56 * 1024 * 1024))

    # Weight's block index is constant across the grid -> one buffer is enough.
    try:
        w_spec = pl.BlockSpec((1, D), lambda i: (0, 0),
                              pipeline_mode=pl.Buffered(1))
    except TypeError:  # older BlockSpec without pipeline_mode kwarg
        w_spec = pl.BlockSpec((1, D), lambda i: (0, 0))

    # TODO(synk): if d_model is not a multiple of 128, pad the channel axis once
    # at model setup so stores stay lane-dense (unmasked vst); correctness here
    # is unaffected because the block's last dim equals the full array dim.

    out = pl.pallas_call(
        functools.partial(_rmsnorm_kernel, eps=float(eps)),
        out_shape=jax.ShapeDtypeStruct((rows, D), x.dtype),
        grid_spec=pltpu.PrefetchScalarGridSpec(
            num_scalar_prefetch=0,
            grid=(grid,),
            in_specs=[
                pl.BlockSpec((target, D), lambda i: (i, 0)),   # x tile
                w_spec,                                        # resident weight
            ],
            out_specs=pl.BlockSpec((target, D), lambda i: (i, 0)),
        ),
        compiler_params=pltpu.CompilerParams(
            dimension_semantics=("parallel",),
            vmem_limit_bytes=vmem_limit),
    )(x2, w2)

    return out.reshape(x.shape)


def rms_norm_reference(x, weight, eps=1e-5):
    xf = x.astype(jnp.float32)
    inv = jax.lax.rsqrt(jnp.mean(xf * xf, axis=-1, keepdims=True) + eps)
    return (xf * inv * weight.astype(jnp.float32)).astype(x.dtype)


if __name__ == "__main__":
    key = jax.random.PRNGKey(0)
    kx, kw = jax.random.split(key)

    batch, seq, d_model = 2, 16, 128
    eps = 1e-5

    x = jax.random.normal(kx, (batch, seq, d_model), jnp.float32)
    # Module initializes weight = ones; perturb it so the per-channel scale
    # path is actually exercised.
    weight = jnp.ones((d_model,), jnp.float32) \
        + 0.01 * jax.random.normal(kw, (d_model,), jnp.float32)

    # Case 1: f32, auto block sizing (rows=32 -> 16-row blocks, grid of 2).
    out = jax.block_until_ready(rms_norm(x, weight, eps=eps))
    ref = rms_norm_reference(x, weight, eps=eps)
    assert out.shape == x.shape and out.dtype == x.dtype
    np.testing.assert_allclose(np.asarray(out), np.asarray(ref),
                               rtol=1e-5, atol=1e-5)

    # Case 2: bf16 input with rows not a multiple of the block -> exercises
    # dtype-aware sublane rounding (16-row blocks) and unpadded tail masking.
    xb = jax.random.normal(kx, (3, 5, d_model), jnp.float32).astype(jnp.bfloat16)
    wb = weight.astype(jnp.bfloat16)
    outb = jax.block_until_ready(rms_norm(xb, wb, eps=eps))
    refb = rms_norm_reference(xb, wb, eps=eps)
    assert outb.shape == xb.shape and outb.dtype == xb.dtype
    np.testing.assert_allclose(np.asarray(outb).astype(np.float32),
                               np.asarray(refb).astype(np.float32),
                               rtol=2e-2, atol=2e-2)

    print("KERNEL_OK")
</pallas_src>

<mosaic_0001>
module attributes {stable_mosaic.version = 11 : i64} {
  func.func @_rmsnorm_kernel(%arg0: i32, %arg1: memref<16x128xf32, #tpu.memory_space<vmem>>, %arg2: memref<1x128xf32, #tpu.memory_space<vmem>>, %arg3: memref<16x128xf32, #tpu.memory_space<vmem>>) attributes {dimension_semantics = [#tpu.dimension_semantics<parallel>], iteration_bounds = array<i64: 2>, scalar_prefetch = 0 : i64, scratch_operands = 0 : i64, tpu.core_type = #tpu.core_type<tc>, window_params = [{transform_indices = @transform_0, window_bounds = array<i64: 16, 128>}, {pipeline_mode = #tpu.pipeline_mode<synchronous>, transform_indices = @transform_1, window_bounds = array<i64: 1, 128>}, {transform_indices = @transform_2, window_bounds = array<i64: 16, 128>}]} {
    %c0 = arith.constant 0 : index
    %c0_0 = arith.constant 0 : index
    %0 = vector.load %arg1[%c0, %c0_0] : memref<16x128xf32, #tpu.memory_space<vmem>>, vector<16x128xf32>
    %1 = arith.mulf %0, %0 : vector<16x128xf32>
    %cst = arith.constant dense<0.000000e+00> : vector<16xf32>
    %2 = vector.multi_reduction <add>, %1, %cst [1] : vector<16x128xf32> to vector<16xf32>
    %3 = vector.shape_cast %2 : vector<16xf32> to vector<16x1xf32>
    %cst_1 = arith.constant 1.280000e+02 : f32
    %4 = vector.broadcast %cst_1 : f32 to vector<16x1xf32>
    %5 = arith.divf %3, %4 : vector<16x1xf32>
    %cst_2 = arith.constant 9.99999974E-6 : f32
    %6 = vector.broadcast %cst_2 : f32 to vector<16x1xf32>
    %7 = arith.addf %5, %6 : vector<16x1xf32>
    %8 = math.rsqrt %7 : vector<16x1xf32>
    %c0_3 = arith.constant 0 : index
    %c0_4 = arith.constant 0 : index
    %9 = vector.load %arg2[%c0_3, %c0_4] : memref<1x128xf32, #tpu.memory_space<vmem>>, vector<1x128xf32>
    %10 = vector.broadcast %8 : vector<16x1xf32> to vector<16x128xf32>
    %11 = vector.broadcast %9 : vector<1x128xf32> to vector<16x128xf32>
    %12 = arith.mulf %10, %11 : vector<16x128xf32>
    %13 = arith.mulf %0, %12 : vector<16x128xf32>
    %c0_5 = arith.constant 0 : index
    %c0_6 = arith.constant 0 : index
    %14 = vector.load %arg3[%c0_5, %c0_6] : memref<16x128xf32, #tpu.memory_space<vmem>>, vector<16x128xf32>
    tpu.vector_store %arg3[%c0_5, %c0_6], %13 {strides = array<i32>} : memref<16x128xf32, #tpu.memory_space<vmem>>, vector<16x128xf32>,
    return
  }
  func.func @transform_0(%arg0: i32) -> (i32, i32) {
    %c0_i32 = arith.constant 0 : i32
    %c0_i32_0 = arith.constant 0 : i32
    return %arg0, %c0_i32 : i32, i32
  }
  func.func @transform_1(%arg0: i32) -> (i32, i32) {
    %c0_i32 = arith.constant 0 : i32
    %c0_i32_0 = arith.constant 0 : i32
    %c0_i32_1 = arith.constant 0 : i32
    return %c0_i32, %c0_i32_0 : i32, i32
  }
  func.func @transform_2(%arg0: i32) -> (i32, i32) {
    %c0_i32 = arith.constant 0 : i32
    %c0_i32_0 = arith.constant 0 : i32
    return %arg0, %c0_i32 : i32, i32
  }
}

</mosaic_0001>

<llo_original>
// kernel: tpu_custom_call.1
$region0: #{tpu_custom_call.1}
  #allocation0 [shape = 'u32[]', space=smem, size = 0x4, offset = 0x4, fixed_abs, tag = 'smem constant byte address 0x4 - core index']
  #allocation1 [shape = 'u32[144,128]{1,0:T(1,128)}', space=vmem, size = 0x12000, scoped, tag = 'internal scratch']
  %s0 = inlined_call_operand.hbm [shape: f32[32,128], index: 0, kind: input, shape index: {}]
  %s1 = inlined_call_operand.vmem [shape: f32[1,128], index: 1, kind: input, shape index: {}]
  %s2 = inlined_call_operand.hbm [shape: f32[32,128], index: 2, kind: output, shape index: {}]
  %s3 = sld [smem:[#allocation0]]
  $region45: #{tpu_custom_call.1} parent=0
    _
  %s5 = ssub.s32 1, %s3
  %s6 = scalar_select 0, %s5, %s3
  $region1: #{tpu_custom_call.1} parent=0
    #allocation2 [shape = 'u8[16384]{0}', space=vmem, size = 0x4000, scoped, tag = 'input window, operand 0']
    #allocation3 [shape = 's32[2]{0}', space=sflag, size = 0x8, scoped, tag = 'scoped memory for tpu_custom_call.1']
    #allocation4 [shape = 's32[2]{0}', space=sflag, size = 0x8, scoped, tag = 'scoped memory for tpu_custom_call.1']
    #allocation5 [shape = 'u8[16384]{0}', space=vmem, size = 0x4000, scoped, tag = 'output window, operand 0']
    %7 = vsyncpa [#allocation3], 0
    %s8 = scalar_lea.sflag [#allocation3], 1
    %9 = vsyncpa %s8, 0
    %10 = vsyncpa [#allocation4], 0
    %s11 = scalar_lea.sflag [#allocation4], 1
    %12 = vsyncpa %s11, 0
    loop: start=0, step=1, limit=4
    $region2: #{tpu_custom_call.1} parent=1 // loop_pre_header
      _
    $region3: #{tpu_custom_call.1} parent=1 // loop_header
      %s14 = sphi 0, %s18
      %p15 = scmp.ge.s32.totalorder %s14, 4
      %s24 = sphi 0, %s26
      %s27 = sphi 0, %s24
      %s28 = sphi 0, %s27
      %s44 = sphi 0, %s28
      %s48 = sphi 0, %s48
      %s50 = sphi 0, %s48
      %s51 = sphi 0, %s50
      %s65 = sphi 0, %s51
      %s71 = sphi 0, %s73
      %s74 = sphi 0, %s71
      %s75 = sphi 0, %s74
      %s91 = sphi 0, %s75
    $region4: #{tpu_custom_call.1} parent=1 // loop_header_branch
      %17 = sbr.rel (%p15) target = $region8
    $region5: #{tpu_custom_call.1} parent=1 // loop_body
      %s19 = ssub.s32 %s14, 1
      %s20 = ssub.s32 %s14, 2
      %s21 = sadd.s32 %s14, 1
      %s22 = ssub.s32 %s14, %s21
      %p23 = scmp.eq.s32.totalorder %s22, 0
      %s25 = sadd.s32 %s24, 1
      %s26 = scalar_select %p23, %s24, %s25
      %p29 = pneg %p23
      %p30 = scmp.eq.s32.totalorder %s14, 1
      %p31 = por %p29, %p30
      %p32 = scmp.ne.s32.totalorder %s24, %s27
      %p33 = scmp.eq.s32.totalorder %s14, 0
      %p34 = por %p32, %p33
      %p35 = scmp.ne.s32.totalorder %s24, %s27
      %p36 = scmp.eq.s32.totalorder %s19, 1
      %p37 = por %p35, %p36
      %p38 = scmp.ne.s32.totalorder %s27, %s28
      %p39 = scmp.eq.s32.totalorder %s19, 0
      %p40 = por %p38, %p39
      %p41 = scmp.ne.s32.totalorder %s27, %s28
      %p42 = scmp.eq.s32.totalorder %s20, 1
      %p43 = por %p41, %p42
      %p45 = scmp.ne.s32.totalorder %s28, %s44
      %p46 = scmp.eq.s32.totalorder %s20, 0
      %p47 = por %p45, %p46
      %s49 = sadd.s32 %s48, 1
      %p52 = scmp.eq.s32.totalorder %s14, 1
      %p53 = scmp.ne.s32.totalorder %s48, %s50
      %p54 = scmp.eq.s32.totalorder %s14, 0
      %p55 = por %p53, %p54
      %p56 = scmp.ne.s32.totalorder %s48, %s50
      %p57 = scmp.eq.s32.totalorder %s19, 1
      %p58 = por %p56, %p57
      %p59 = scmp.ne.s32.totalorder %s50, %s51
      %p60 = scmp.eq.s32.totalorder %s19, 0
      %p61 = por %p59, %p60
      %p62 = scmp.ne.s32.totalorder %s50, %s51
      %p63 = scmp.eq.s32.totalorder %s20, 1
      %p64 = por %p62, %p63
      %p66 = scmp.ne.s32.totalorder %s51, %s65
      %p67 = scmp.eq.s32.totalorder %s20, 0
      %p68 = por %p66, %p67
      %s69 = ssub.s32 %s14, %s21
      %p70 = scmp.eq.s32.totalorder %s69, 0
      %s72 = sadd.s32 %s71, 1
      %s73 = scalar_select %p70, %s71, %s72
      %p76 = pneg %p70
      %p77 = scmp.eq.s32.totalorder %s14, 1
      %p78 = por %p76, %p77
      %p79 = scmp.ne.s32.totalorder %s71, %s74
      %p80 = scmp.eq.s32.totalorder %s14, 0
      %p81 = por %p79, %p80
      %p82 = scmp.ne.s32.totalorder %s71, %s74
      %p83 = scmp.eq.s32.totalorder %s19, 1
      %p84 = por %p82, %p83
      %p85 = scmp.ne.s32.totalorder %s74, %s75
      %p86 = scmp.eq.s32.totalorder %s19, 0
      %p87 = por %p85, %p86
      %p88 = scmp.ne.s32.totalorder %s74, %s75
      %p89 = scmp.eq.s32.totalorder %s20, 1
      %p90 = por %p88, %p89
      %p92 = scmp.ne.s32.totalorder %s75, %s91
      %p93 = scmp.eq.s32.totalorder %s20, 0
      %p94 = por %p92, %p93
      %p95 = scmp.le.s32.totalorder 1, %s14
      %p96 = scmp.lt.s32.totalorder %s14, 3
      %p97 = pnand %p95, %p96
      %p98 = pneg %p97
      // Predicated region
      $region9: #{tpu_custom_call.1} parent=5 // pred_check
        _
      $region10: #{tpu_custom_call.1} parent=5 // pred_check_branch
        %100 = sbr.rel (%p97) target = $region12
      $region11: #{tpu_custom_call.1} parent=5 // pred_region
        %s101 = ssub.s32 %s14, 1
        // Predicated region
        $region13: #{tpu_custom_call.1} parent=11 // pred_check
          %p102 = pneg %p61
        $region14: #{tpu_custom_call.1} parent=11 // pred_check_branch
          %104 = sbr.rel (%p102) target = $region16
        $region15: #{tpu_custom_call.1} parent=11 // pred_region
          _
        $region16: #{tpu_custom_call.1} parent=11 // pred_fallthru
          _
      $region12: #{tpu_custom_call.1} parent=5 // pred_fallthru
        _
      %p105 = scmp.lt.s32.totalorder %s14, 2
      // Predicated region
      $region17: #{tpu_custom_call.1} parent=5 // pred_check
        %p106 = pneg %p105
      $region18: #{tpu_custom_call.1} parent=5 // pred_check_branch
        %108 = sbr.rel (%p106) target = $region20
      $region19: #{tpu_custom_call.1} parent=5 // pred_region
        // Predicated region
        $region21: #{tpu_custom_call.1} parent=19 // pred_check
          %p109 = pneg %p34
        $region22: #{tpu_custom_call.1} parent=19 // pred_check_branch
          %111 = sbr.rel (%p109) target = $region24
        $region23: #{tpu_custom_call.1} parent=19 // pred_region
          %s112 = sand.u32 %s24, 1
          %s113 = scalar_lea.sflag [#allocation3], %s112
          %s114 = sand.u32 %s24, 1
          %s115 = smul.addr %s114, 16
          %s116 = scalar_lea.vmem [#allocation2], %s115
          %s117 = smul.u32 2, %s14
          %s119 = ssub.s32 256, 256
          %120 = vsyncadd %s113, %s119
          %s121 = smul.addr %s117, 128
          %s122 = scalar_lea.hbm %s0, %s121
          %s123 = sshll.u32 %s116, 4
          %s124 = int_to_ptr.vmem [resolvable:$true] %s123
          %129 = dma.hbm_to_vmem [thread:$0]  %s122, 256, %s124, %s113, 128, 128, 8
        $region24: #{tpu_custom_call.1} parent=19 // pred_fallthru
          _
      $region20: #{tpu_custom_call.1} parent=5 // pred_fallthru
        _
      %p130 = scmp.le.s32.totalorder 1, %s14
      %p131 = scmp.lt.s32.totalorder %s14, 3
      %p132 = pnand %p130, %p131
      %p133 = pneg %p132
      // Predicated region
      $region25: #{tpu_custom_call.1} parent=5 // pred_check
        _
      $region26: #{tpu_custom_call.1} parent=5 // pred_check_branch
        %135 = sbr.rel (%p132) target = $region28
      $region27: #{tpu_custom_call.1} parent=5 // pred_region
        %s136 = ssub.s32 %s14, 1
        %s137 = sand.u32 %s27, 1
        %s138 = scalar_lea.sflag [#allocation3], %s137
        %s139 = sand.u32 %s27, 1
        %s140 = smul.addr %s139, 16
        %s141 = scalar_lea.vmem [#allocation2], %s140
        // Predicated region
        $region29: #{tpu_custom_call.1} parent=27 // pred_check
          %p142 = pneg %p40
        $region30: #{tpu_custom_call.1} parent=27 // pred_check_branch
          %144 = sbr.rel (%p142) target = $region32
        $region31: #{tpu_custom_call.1} parent=27 // pred_region
          %145 = dma.done %s138, 256
        $region32: #{tpu_custom_call.1} parent=27 // pred_fallthru
          _
        %s146 = sand.u32 %s27, 1
        %s147 = scalar_lea.sflag [#allocation3], %s146
        %s148 = sand.u32 %s27, 1
        %s149 = smul.addr %s148, 16
        %s150 = scalar_lea.vmem [#allocation2], %s149
        %p151 = pneg %p40
        %p152 = pneg %p37
        %p153 = pneg %p61
        %p154 = pneg %p58
        %p155 = pneg %p87
        %p156 = pneg %p84
        %s157 = sand.u32 %s74, 1
        %s158 = scalar_lea.sflag [#allocation4], %s157
        %s159 = sand.u32 %s74, 1
        %s160 = smul.addr %s159, 16
        %s161 = scalar_lea.vmem [#allocation5], %s160
        %s162 = smul.u32 2, %s19
        %s163 = smul.u32 2, %s19
        %v164 = vld [vmem:[%s141] sm:$0xff]
        %v165 = vld [vmem:[%s141 + $0x8] sm:$0xff]
        %v166 = vmul.f32 %v164, %v164
        %v167 = vmul.f32 %v165, %v165
        %168 = vadd.xlane.f32.xlu0 %v166
        %v169 = vpop.xlane.xlu0 %168
        %170 = vadd.xlane.f32.xlu0 %v167
        %v171 = vpop.xlane.xlu0 %170
        %v172 = vrcp.pop 128.0
        %v173 = vmul.f32 %v169, %v172
        %v174 = vmul.f32 %v171, %v172
        %v175 = vadd.f32 %v173, 1e-05
        %v176 = vadd.f32 %v174, 1e-05
        %v177 = vrsqrt.pop %v175
        %v178 = vrsqrt.pop %v176
        %v179 = vld [vmem:[%s1] sm:$0x1]
        %v181 = vlaneseq
        %v182 = vshrl.u32 %v181, 7
        %v183 = vsub.s32 0, %v182
        %v184 = vrot.slane %v179, %v183
        %v186 = vmul.f32 %v177, %v184
        %v187 = vmul.f32 %v178, %v184
        %v188 = vmul.f32 %v164, %v186
        %v189 = vmul.f32 %v165, %v187
        %190 = vst [vmem:[%s161] sm:$0xff] %v188
        %191 = vst [vmem:[%s161 + $0x8] sm:$0xff] %v189
        %s192 = sand.u32 %s74, 1
        %s193 = scalar_lea.sflag [#allocation4], %s192
        %s194 = sand.u32 %s74, 1
        %s195 = smul.addr %s194, 16
        %s196 = scalar_lea.vmem [#allocation5], %s195
        // Predicated region
        $region33: #{tpu_custom_call.1} parent=27 // pred_check
          %p197 = pneg %p84
        $region34: #{tpu_custom_call.1} parent=27 // pred_check_branch
          %199 = sbr.rel (%p197) target = $region36
        $region35: #{tpu_custom_call.1} parent=27 // pred_region
          %s200 = smul.u32 2, %s19
          %s202 = ssub.s32 256, 256
          %203 = vsyncadd %s193, %s202
          %s204 = smul.addr %s200, 128
          %s205 = scalar_lea.hbm %s2, %s204
          %s206 = sshll.u32 %s196, 4
          %s207 = int_to_ptr.vmem [resolvable:$true] %s206
          %212 = dma.vmem_to_hbm [thread:$0]  %s207, 256, %s205, %s193, 128, 128, 8
        $region36: #{tpu_custom_call.1} parent=27 // pred_fallthru
          _
      $region28: #{tpu_custom_call.1} parent=5 // pred_fallthru
        _
      %p213 = scmp.le.s32.totalorder 2, %s14
      // Predicated region
      $region37: #{tpu_custom_call.1} parent=5 // pred_check
        %p214 = pneg %p213
      $region38: #{tpu_custom_call.1} parent=5 // pred_check_branch
        %216 = sbr.rel (%p214) target = $region40
      $region39: #{tpu_custom_call.1} parent=5 // pred_region
        %s217 = ssub.s32 %s14, 2
        // Predicated region
        $region41: #{tpu_custom_call.1} parent=39 // pred_check
          %p218 = pneg %p90
        $region42: #{tpu_custom_call.1} parent=39 // pred_check_branch
          %220 = sbr.rel (%p218) target = $region44
        $region43: #{tpu_custom_call.1} parent=39 // pred_region
          %s221 = sand.u32 %s75, 1
          %s222 = scalar_lea.sflag [#allocation4], %s221
          %s223 = sand.u32 %s75, 1
          %s224 = smul.addr %s223, 16
          %s225 = scalar_lea.vmem [#allocation5], %s224
          %226 = dma.done %s222, 256
        $region44: #{tpu_custom_call.1} parent=39 // pred_fallthru
          _
      $region40: #{tpu_custom_call.1} parent=5 // pred_fallthru
        _
    $region6: #{tpu_custom_call.1} parent=1 // loop_footer
      %s18 = sadd.s32 1, %s14
    $region7: #{tpu_custom_call.1} parent=1 // loop_footer_branch
      %13 = sbr.rel target = $region3
    $region8: #{tpu_custom_call.1} parent=1 // loop_exit
      _
    %227 = vsyncpa [#allocation3], 1
    %s228 = scalar_lea.sflag [#allocation3], 1
    %229 = vsyncpa %s228, 1
    %230 = vsyncpa [#allocation4], 1
    %s231 = scalar_lea.sflag [#allocation4], 1
    %232 = vsyncpa %s231, 1

</llo_original>
